<compile_context>
chip_gen: v7x
topology: tpu7x:2x2x1
jax: 0.10.0
libtpu: 0.0.40
codegen_flags: <defaults>
</compile_context>

<pallas_src>
import functools

import jax
import jax.numpy as jnp
from jax.experimental import pallas as pl
from jax.experimental.pallas import tpu as pltpu


def _flash_attn_kernel(q_ref, k_ref, v_ref, o_ref, qs_sc, m_sc, l_sc,
                       *maybe_acc, inv_temperature):
    # acc lives in the output block when the output dtype is f32 (it persists
    # across the kv axis); otherwise a dedicated f32 scratch is used.
    acc_ref = maybe_acc[0] if maybe_acc else o_ref
    kv = pl.program_id(2)

    @pl.when(kv == 0)
    def _():
        # Hoisted out of the kv loop: scale q by 1/temperature in f32, then
        # downcast once to bf16 as the MXU lhs operand.
        qs_sc[...] = (q_ref[...] * inv_temperature).astype(qs_sc.dtype)
        m_sc[...] = jnp.full_like(m_sc, -jnp.inf)
        l_sc[...] = jnp.zeros_like(l_sc)
        acc_ref[...] = jnp.zeros_like(acc_ref)

    k = k_ref[...].astype(jnp.bfloat16)        # (tb, tk, D)
    v = v_ref[...].astype(jnp.bfloat16)        # (tb, tk, Dv)

    # scores = (q/T) @ k^T without materializing the transpose; bf16 operands,
    # f32 accumulation on the MXU.
    s = jnp.einsum("bqd,bkd->bqk", qs_sc[...], k,
                   preferred_element_type=jnp.float32)   # (tb, tq, tk) f32

    # Online softmax update (all f32).
    m_prev = m_sc[...]
    m_new = jnp.maximum(m_prev, jnp.max(s, axis=-1, keepdims=True))
    alpha = jnp.exp(m_prev - m_new)
    p = jnp.exp(s - m_new)

    l_sc[...] = alpha * l_sc[...] + jnp.sum(p, axis=-1, keepdims=True)
    acc_ref[...] = alpha * acc_ref[...] + jnp.einsum(
        "bqk,bkd->bqd", p.astype(jnp.bfloat16), v,
        preferred_element_type=jnp.float32)
    m_sc[...] = m_new

    @pl.when(kv == pl.num_programs(2) - 1)
    def _():
        # Dropout is identity in eval mode. Exact reciprocal: once per q tile.
        inv_l = pl.reciprocal(l_sc[...])
        o_ref[...] = (acc_ref[...] * inv_l).astype(o_ref.dtype)


def _divisor_tile(dim, target, aligns):
    """Largest t <= target dividing dim, multiple of some align (else full dim)."""
    if dim <= target:
        return dim
    for align in aligns:
        t = (target // align) * align
        while t >= align:
            if dim % t == 0:
                return t
            t -= align
    return dim  # no aligned divisor: full extent (always a legal block shape)


def attention(q, k, v, temperature):
    """Pallas equivalent of Attention.forward(q, k, v) (dropout = identity)."""
    B, Lq, D = q.shape
    Bk, Lk, Dk = k.shape
    Bv, Lkv, Dv = v.shape
    assert D == Dk and Bk == B and Bv == B and Lkv == Lk

    out_dtype = q.dtype
    acc_in_out = out_dtype == jnp.float32  # accumulate directly into o_ref

    # Generation-aware VMEM budget (~78% of physical: ~50 MiB v7x, ~100 MiB v5e/v6e).
    try:
        vmem_cap = int(pltpu.get_tpu_info().vmem_capacity_bytes)
    except Exception:
        vmem_cap = 64 * 1024 * 1024
    vmem_budget = (vmem_cap * 25) // 32

    # Tile targets: big tq (K/V reuse lever), small tb, 128-aligned tk.
    tq_target = 1024 if vmem_cap >= 128 * 1024 * 1024 else 512
    tb = _divisor_tile(B, 4, (1,))
    tq = _divisor_tile(Lq, tq_target, (8, 1))
    tk = _divisor_tile(Lk, 512, (128, 8, 1))

    in_sz = jnp.dtype(q.dtype).itemsize
    out_sz = jnp.dtype(out_dtype).itemsize

    def est_bytes(tb_, tq_, tk_):
        # Double-buffered in/out blocks + persistent scratch (lane-padded).
        blocks = 2 * in_sz * (tb_ * tq_ * D + tb_ * tk_ * D + tb_ * tk_ * Dv) \
            + 2 * out_sz * tb_ * tq_ * Dv
        scratch = 2 * tb_ * tq_ * max(D, 128)        # bf16 scaled-q
        scratch += 2 * 4 * tb_ * tq_ * 128           # m, l (lane-padded to 128)
        if not acc_in_out:
            scratch += 4 * tb_ * tq_ * max(Dv, 128)  # f32 acc scratch
        return blocks + scratch

    # Shrink tb first (reuse is governed by tq, not tb), then tq, then tk.
    for _ in range(32):
        if est_bytes(tb, tq, tk) <= vmem_budget:
            break
        if tb > 1:
            tb = _divisor_tile(B, max(1, tb // 2), (1,))
        elif tq > 128:
            tq = _divisor_tile(Lq, tq // 2, (8, 1))
        elif tk > 128:
            tk = _divisor_tile(Lk, tk // 2, (128, 8, 1))
        else:
            break

    # Keep both v7x TensorCores busy: parallel extent (B//tb)*(Lq//tq) >= 2.
    if (B // tb) * (Lq // tq) < 2:
        if tb > 1:
            tb = _divisor_tile(B, max(1, tb // 2), (1,))
        elif Lq >= 16:
            tq = _divisor_tile(Lq, Lq // 2, (8, 1))

    vmem_limit = int(min(vmem_budget,
                         max(32 * 1024 * 1024, 2 * est_bytes(tb, tq, tk))))

    scratch_shapes = [
        pltpu.VMEM((tb, tq, D), jnp.bfloat16),   # scaled q (bf16 MXU operand)
        # (tb, tq, 1) is lane-padded in VMEM; accepted for cheap lane-broadcast
        # against the (tb, tq, tk) score tile.
        pltpu.VMEM((tb, tq, 1), jnp.float32),    # running max m
        pltpu.VMEM((tb, tq, 1), jnp.float32),    # running denom l
    ]
    if not acc_in_out:
        scratch_shapes.append(pltpu.VMEM((tb, tq, Dv), jnp.float32))  # acc

    kernel = functools.partial(
        _flash_attn_kernel, inv_temperature=1.0 / float(temperature))

    return pl.pallas_call(
        kernel,
        out_shape=jax.ShapeDtypeStruct((B, Lq, Dv), out_dtype),
        grid_spec=pltpu.PrefetchScalarGridSpec(
            num_scalar_prefetch=0,
            grid=(B // tb, Lq // tq, Lk // tk),
            in_specs=[
                pl.BlockSpec((tb, tq, D), lambda b, i, j: (b, i, 0)),
                pl.BlockSpec((tb, tk, D), lambda b, i, j: (b, j, 0)),
                pl.BlockSpec((tb, tk, Dv), lambda b, i, j: (b, j, 0)),
            ],
            out_specs=pl.BlockSpec((tb, tq, Dv), lambda b, i, j: (b, i, 0)),
            scratch_shapes=scratch_shapes,
        ),
        compiler_params=pltpu.CompilerParams(
            dimension_semantics=("parallel", "parallel", "arbitrary"),
            vmem_limit_bytes=vmem_limit,
        ),
    )(q, k, v)


def _reference(q, k, v, temperature):
    scores = jnp.einsum("bqd,bkd->bqk", q, k) / temperature
    probs = jax.nn.softmax(scores, axis=2)
    return jnp.einsum("bqk,bkd->bqd", probs, v)


if __name__ == "__main__":
    key = jax.random.PRNGKey(0)

    # Test 1: small shapes typical of the module (single tile, f32 path).
    kq, kk, kv = jax.random.split(key, 3)
    B, Lq, Lk, D, Dv = 2, 8, 8, 32, 32
    temperature = float(jnp.sqrt(jnp.float32(D)))
    q = jax.random.normal(kq, (B, Lq, D), dtype=jnp.float32)
    k = jax.random.normal(kk, (B, Lk, D), dtype=jnp.float32)
    v = jax.random.normal(kv, (B, Lk, Dv), dtype=jnp.float32)

    out = jax.block_until_ready(attention(q, k, v, temperature))
    ref = _reference(q, k, v, temperature)
    assert out.shape == (B, Lq, Dv)
    # bf16 MXU operands -> looser tolerance than pure-f32 math.
    assert jnp.allclose(out, ref, atol=3e-2, rtol=3e-2), "mismatch (small f32)"

    # Test 2: exercises the multi-step online-softmax path (Lk tiled) and a
    # lane-dense (128-wide) output.
    kq2, kk2, kv2 = jax.random.split(jax.random.PRNGKey(1), 3)
    B2, Lq2, Lk2, D2, Dv2 = 2, 128, 1024, 64, 128
    temperature2 = float(jnp.sqrt(jnp.float32(D2)))
    q2 = jax.random.normal(kq2, (B2, Lq2, D2), dtype=jnp.float32)
    k2 = jax.random.normal(kk2, (B2, Lk2, D2), dtype=jnp.float32)
    v2 = jax.random.normal(kv2, (B2, Lk2, Dv2), dtype=jnp.float32)

    out2 = jax.block_until_ready(attention(q2, k2, v2, temperature2))
    ref2 = _reference(q2, k2, v2, temperature2)
    assert out2.shape == (B2, Lq2, Dv2)
    assert jnp.allclose(out2, ref2, atol=3e-2, rtol=3e-2), "mismatch (tiled f32)"

    # Test 3: bf16 inputs/outputs -> exercises the separate f32 acc-scratch path.
    q3 = q.astype(jnp.bfloat16)
    k3 = k.astype(jnp.bfloat16)
    v3 = v.astype(jnp.bfloat16)
    out3 = jax.block_until_ready(attention(q3, k3, v3, temperature))
    ref3 = _reference(q3.astype(jnp.float32), k3.astype(jnp.float32),
                      v3.astype(jnp.float32), temperature)
    assert out3.shape == (B, Lq, Dv) and out3.dtype == jnp.bfloat16
    assert jnp.allclose(out3.astype(jnp.float32), ref3,
                        atol=5e-2, rtol=5e-2), "mismatch (bf16)"

    print("KERNEL_OK")
</pallas_src>

<mosaic_0001>
module attributes {stable_mosaic.version = 11 : i64} {
  func.func @_flash_attn_kernel(%arg0: i32, %arg1: i32, %arg2: i32, %arg3: memref<1x8x32xf32, #tpu.memory_space<vmem>>, %arg4: memref<1x8x32xf32, #tpu.memory_space<vmem>>, %arg5: memref<1x8x32xf32, #tpu.memory_space<vmem>>, %arg6: memref<1x8x32xf32, #tpu.memory_space<vmem>>, %arg7: memref<1x8x32xbf16, #tpu.memory_space<vmem>>, %arg8: memref<1x8x1xf32, #tpu.memory_space<vmem>>, %arg9: memref<1x8x1xf32, #tpu.memory_space<vmem>>) attributes {dimension_semantics = [#tpu.dimension_semantics<parallel>, #tpu.dimension_semantics<parallel>, #tpu.dimension_semantics<arbitrary>], iteration_bounds = array<i64: 2, 1, 1>, scalar_prefetch = 0 : i64, scratch_operands = 3 : i64, tpu.core_type = #tpu.core_type<tc>, window_params = [{transform_indices = @transform_0, window_bounds = array<i64: 1, 8, 32>}, {transform_indices = @transform_1, window_bounds = array<i64: 1, 8, 32>}, {transform_indices = @transform_2, window_bounds = array<i64: 1, 8, 32>}, {transform_indices = @transform_3, window_bounds = array<i64: 1, 8, 32>}]} {
    %c0_i32 = arith.constant 0 : i32
    %0 = arith.cmpi eq, %arg2, %c0_i32 : i32
    %1 = arith.extui %0 : i1 to i32
    %c0_i32_0 = arith.constant 0 : i32
    %2 = arith.cmpi ne, %1, %c0_i32_0 : i32
    scf.if %2 {
      %c0_32 = arith.constant 0 : index
      %c0_33 = arith.constant 0 : index
      %c0_34 = arith.constant 0 : index
      %35 = vector.load %arg3[%c0_32, %c0_33, %c0_34] : memref<1x8x32xf32, #tpu.memory_space<vmem>>, vector<1x8x32xf32>
      %cst_35 = arith.constant 0.176776692 : f32
      %36 = vector.broadcast %cst_35 : f32 to vector<1x8x32xf32>
      %37 = arith.mulf %35, %36 : vector<1x8x32xf32>
      %38 = arith.truncf %37 : vector<1x8x32xf32> to vector<1x8x32xbf16>
      %c0_36 = arith.constant 0 : index
      %c0_37 = arith.constant 0 : index
      %c0_38 = arith.constant 0 : index
      %39 = vector.load %arg7[%c0_36, %c0_37, %c0_38] : memref<1x8x32xbf16, #tpu.memory_space<vmem>>, vector<1x8x32xbf16>
      tpu.vector_store %arg7[%c0_36, %c0_37, %c0_38], %38 {strides = array<i32>} : memref<1x8x32xbf16, #tpu.memory_space<vmem>>, vector<1x8x32xbf16>,
      %cst_39 = arith.constant 0xFF800000 : f32
      %40 = vector.broadcast %cst_39 : f32 to vector<1x8x1xf32>
      %c0_40 = arith.constant 0 : index
      %c0_41 = arith.constant 0 : index
      %c0_42 = arith.constant 0 : index
      %41 = vector.load %arg8[%c0_40, %c0_41, %c0_42] : memref<1x8x1xf32, #tpu.memory_space<vmem>>, vector<1x8x1xf32>
      tpu.vector_store %arg8[%c0_40, %c0_41, %c0_42], %40 {strides = array<i32>} : memref<1x8x1xf32, #tpu.memory_space<vmem>>, vector<1x8x1xf32>,
      %cst_43 = arith.constant 0.000000e+00 : f32
      %42 = vector.broadcast %cst_43 : f32 to vector<1x8x1xf32>
      %c0_44 = arith.constant 0 : index
      %c0_45 = arith.constant 0 : index
      %c0_46 = arith.constant 0 : index
      %43 = vector.load %arg9[%c0_44, %c0_45, %c0_46] : memref<1x8x1xf32, #tpu.memory_space<vmem>>, vector<1x8x1xf32>
      tpu.vector_store %arg9[%c0_44, %c0_45, %c0_46], %42 {strides = array<i32>} : memref<1x8x1xf32, #tpu.memory_space<vmem>>, vector<1x8x1xf32>,
      %cst_47 = arith.constant 0.000000e+00 : f32
      %44 = vector.broadcast %cst_47 : f32 to vector<1x8x32xf32>
      %c0_48 = arith.constant 0 : index
      %c0_49 = arith.constant 0 : index
      %c0_50 = arith.constant 0 : index
      %45 = vector.load %arg6[%c0_48, %c0_49, %c0_50] : memref<1x8x32xf32, #tpu.memory_space<vmem>>, vector<1x8x32xf32>
      tpu.vector_store %arg6[%c0_48, %c0_49, %c0_50], %44 {strides = array<i32>} : memref<1x8x32xf32, #tpu.memory_space<vmem>>, vector<1x8x32xf32>,
    } else {
    }
    %c0 = arith.constant 0 : index
    %c0_1 = arith.constant 0 : index
    %c0_2 = arith.constant 0 : index
    %3 = vector.load %arg4[%c0, %c0_1, %c0_2] : memref<1x8x32xf32, #tpu.memory_space<vmem>>, vector<1x8x32xf32>
    %4 = arith.truncf %3 : vector<1x8x32xf32> to vector<1x8x32xbf16>
    %c0_3 = arith.constant 0 : index
    %c0_4 = arith.constant 0 : index
    %c0_5 = arith.constant 0 : index
    %5 = vector.load %arg5[%c0_3, %c0_4, %c0_5] : memref<1x8x32xf32, #tpu.memory_space<vmem>>, vector<1x8x32xf32>
    %6 = arith.truncf %5 : vector<1x8x32xf32> to vector<1x8x32xbf16>
    %c0_6 = arith.constant 0 : index
    %c0_7 = arith.constant 0 : index
    %c0_8 = arith.constant 0 : index
    %7 = vector.load %arg7[%c0_6, %c0_7, %c0_8] : memref<1x8x32xbf16, #tpu.memory_space<vmem>>, vector<1x8x32xbf16>
    "tpu.trace_start"() <{level = 10 : i32, message = "bqd,bkd->bqk"}> : () -> ()
    %cst = arith.constant dense<0.000000e+00> : vector<1x8x8xf32>
    %8 = tpu.matmul %7, %4, %cst {dimension_numbers = #tpu.dot_dimension_numbers<[2], [2], [1], [1], [0, 0, 0, 1, 1, 1], [0], [0]>} : vector<1x8x32xbf16>, vector<1x8x32xbf16>, vector<1x8x8xf32> -> vector<1x8x8xf32>
    "tpu.trace_stop"() : () -> ()
    %c0_9 = arith.constant 0 : index
    %c0_10 = arith.constant 0 : index
    %c0_11 = arith.constant 0 : index
    %9 = vector.load %arg8[%c0_9, %c0_10, %c0_11] : memref<1x8x1xf32, #tpu.memory_space<vmem>>, vector<1x8x1xf32>
    %cst_12 = arith.constant dense<0xFF800000> : vector<1x8xf32>
    %10 = vector.multi_reduction <maximumf>, %8, %cst_12 [2] : vector<1x8x8xf32> to vector<1x8xf32>
    %11 = vector.shape_cast %10 : vector<1x8xf32> to vector<1x8x1xf32>
    %12 = arith.maximumf %9, %11 : vector<1x8x1xf32>
    %13 = arith.subf %9, %12 : vector<1x8x1xf32>
    %14 = math.exp %13 : vector<1x8x1xf32>
    %15 = vector.broadcast %12 : vector<1x8x1xf32> to vector<1x8x8xf32>
    %16 = arith.subf %8, %15 : vector<1x8x8xf32>
    %17 = math.exp %16 : vector<1x8x8xf32>
    %c0_13 = arith.constant 0 : index
    %c0_14 = arith.constant 0 : index
    %c0_15 = arith.constant 0 : index
    %18 = vector.load %arg9[%c0_13, %c0_14, %c0_15] : memref<1x8x1xf32, #tpu.memory_space<vmem>>, vector<1x8x1xf32>
    %19 = arith.mulf %14, %18 : vector<1x8x1xf32>
    %cst_16 = arith.constant dense<0.000000e+00> : vector<1x8xf32>
    %20 = vector.multi_reduction <add>, %17, %cst_16 [2] : vector<1x8x8xf32> to vector<1x8xf32>
    %21 = vector.shape_cast %20 : vector<1x8xf32> to vector<1x8x1xf32>
    %22 = arith.addf %19, %21 : vector<1x8x1xf32>
    %c0_17 = arith.constant 0 : index
    %c0_18 = arith.constant 0 : index
    %c0_19 = arith.constant 0 : index
    %23 = vector.load %arg9[%c0_17, %c0_18, %c0_19] : memref<1x8x1xf32, #tpu.memory_space<vmem>>, vector<1x8x1xf32>
    tpu.vector_store %arg9[%c0_17, %c0_18, %c0_19], %22 {strides = array<i32>} : memref<1x8x1xf32, #tpu.memory_space<vmem>>, vector<1x8x1xf32>,
    %c0_20 = arith.constant 0 : index
    %c0_21 = arith.constant 0 : index
    %c0_22 = arith.constant 0 : index
    %24 = vector.load %arg6[%c0_20, %c0_21, %c0_22] : memref<1x8x32xf32, #tpu.memory_space<vmem>>, vector<1x8x32xf32>
    %25 = vector.broadcast %14 : vector<1x8x1xf32> to vector<1x8x32xf32>
    %26 = arith.mulf %25, %24 : vector<1x8x32xf32>
    %27 = arith.truncf %17 : vector<1x8x8xf32> to vector<1x8x8xbf16>
    "tpu.trace_start"() <{level = 10 : i32, message = "bqk,bkd->bqd"}> : () -> ()
    %cst_23 = arith.constant dense<0.000000e+00> : vector<1x8x32xf32>
    %28 = tpu.matmul %27, %6, %cst_23 {dimension_numbers = #tpu.dot_dimension_numbers<[2], [1], [1], [2], [0, 0, 0, 1, 1, 2], [0], [0]>} : vector<1x8x8xbf16>, vector<1x8x32xbf16>, vector<1x8x32xf32> -> vector<1x8x32xf32>
    "tpu.trace_stop"() : () -> ()
    %29 = arith.addf %26, %28 : vector<1x8x32xf32>
    %c0_24 = arith.constant 0 : index
    %c0_25 = arith.constant 0 : index
    %c0_26 = arith.constant 0 : index
    %30 = vector.load %arg6[%c0_24, %c0_25, %c0_26] : memref<1x8x32xf32, #tpu.memory_space<vmem>>, vector<1x8x32xf32>
    tpu.vector_store %arg6[%c0_24, %c0_25, %c0_26], %29 {strides = array<i32>} : memref<1x8x32xf32, #tpu.memory_space<vmem>>, vector<1x8x32xf32>,
    %c0_27 = arith.constant 0 : index
    %c0_28 = arith.constant 0 : index
    %c0_29 = arith.constant 0 : index
    %31 = vector.load %arg8[%c0_27, %c0_28, %c0_29] : memref<1x8x1xf32, #tpu.memory_space<vmem>>, vector<1x8x1xf32>
    tpu.vector_store %arg8[%c0_27, %c0_28, %c0_29], %12 {strides = array<i32>} : memref<1x8x1xf32, #tpu.memory_space<vmem>>, vector<1x8x1xf32>,
    %c0_i32_30 = arith.constant 0 : i32
    %32 = arith.cmpi eq, %arg2, %c0_i32_30 : i32
    %33 = arith.extui %32 : i1 to i32
    %c0_i32_31 = arith.constant 0 : i32
    %34 = arith.cmpi ne, %33, %c0_i32_31 : i32
    scf.if %34 {
      %c0_32 = arith.constant 0 : index
      %c0_33 = arith.constant 0 : index
      %c0_34 = arith.constant 0 : index
      %35 = vector.load %arg9[%c0_32, %c0_33, %c0_34] : memref<1x8x1xf32, #tpu.memory_space<vmem>>, vector<1x8x1xf32>
      %36 = tpu.reciprocal %35 : vector<1x8x1xf32> -> vector<1x8x1xf32>
      %c0_35 = arith.constant 0 : index
      %c0_36 = arith.constant 0 : index
      %c0_37 = arith.constant 0 : index
      %37 = vector.load %arg6[%c0_35, %c0_36, %c0_37] : memref<1x8x32xf32, #tpu.memory_space<vmem>>, vector<1x8x32xf32>
      %38 = vector.broadcast %36 : vector<1x8x1xf32> to vector<1x8x32xf32>
      %39 = arith.mulf %37, %38 : vector<1x8x32xf32>
      %c0_38 = arith.constant 0 : index
      %c0_39 = arith.constant 0 : index
      %c0_40 = arith.constant 0 : index
      %40 = vector.load %arg6[%c0_38, %c0_39, %c0_40] : memref<1x8x32xf32, #tpu.memory_space<vmem>>, vector<1x8x32xf32>
      tpu.vector_store %arg6[%c0_38, %c0_39, %c0_40], %39 {strides = array<i32>} : memref<1x8x32xf32, #tpu.memory_space<vmem>>, vector<1x8x32xf32>,
    } else {
    }
    return
  }
  func.func @transform_0(%arg0: i32, %arg1: i32, %arg2: i32) -> (i32, i32, i32) {
    %c0_i32 = arith.constant 0 : i32
    %c0_i32_0 = arith.constant 0 : i32
    return %arg0, %arg1, %c0_i32 : i32, i32, i32
  }
  func.func @transform_1(%arg0: i32, %arg1: i32, %arg2: i32) -> (i32, i32, i32) {
    %c0_i32 = arith.constant 0 : i32
    %c0_i32_0 = arith.constant 0 : i32
    return %arg0, %arg2, %c0_i32 : i32, i32, i32
  }
  func.func @transform_2(%arg0: i32, %arg1: i32, %arg2: i32) -> (i32, i32, i32) {
    %c0_i32 = arith.constant 0 : i32
    %c0_i32_0 = arith.constant 0 : i32
    return %arg0, %arg2, %c0_i32 : i32, i32, i32
  }
  func.func @transform_3(%arg0: i32, %arg1: i32, %arg2: i32) -> (i32, i32, i32) {
    %c0_i32 = arith.constant 0 : i32
    %c0_i32_0 = arith.constant 0 : i32
    return %arg0, %arg1, %c0_i32 : i32, i32, i32
  }
}

</mosaic_0001>

<llo_original>
// kernel: tpu_custom_call.1
$region0: #{tpu_custom_call.1}
  #allocation0 [shape = 'u32[]', space=smem, size = 0x4, offset = 0x4, fixed_abs, tag = 'smem constant byte address 0x4 - core index']
  #allocation1 [shape = 'u32[144,128]{1,0:T(1,128)}', space=vmem, size = 0x12000, scoped, tag = 'internal scratch']
  #allocation2 [shape = 'bf16[1,8,32]{2,1,0:T(8,128)(2,1)}', space=vmem, size = 0x800, scoped, tag = 'scratch operand']
  #allocation3 [shape = 'f32[1,8,1]{2,1,0:T(8,128)}', space=vmem, size = 0x1000, scoped, tag = 'scratch operand']
  #allocation4 [shape = 'f32[1,8,1]{2,1,0:T(8,128)}', space=vmem, size = 0x1000, scoped, tag = 'scratch operand']
  %s0 = inlined_call_operand.hbm [shape: f32[2,8,32], index: 0, kind: input, shape index: {}]
  %s1 = inlined_call_operand.hbm [shape: f32[2,8,32], index: 1, kind: input, shape index: {}]
  %s2 = inlined_call_operand.hbm [shape: f32[2,8,32], index: 2, kind: input, shape index: {}]
  %s3 = inlined_call_operand.hbm [shape: f32[2,8,32], index: 3, kind: output, shape index: {}]
  %s4 = sld [smem:[#allocation0]]
  $region65: #{tpu_custom_call.1} parent=0
    _
  %s6 = ssub.s32 1, %s4
  %s7 = scalar_select 0, %s6, %s4
  $region1: #{tpu_custom_call.1} parent=0
    #allocation5 [shape = 'u8[8192]{0}', space=vmem, size = 0x2000, scoped, tag = 'input window, operand 0']
    #allocation6 [shape = 's32[2]{0}', space=sflag, size = 0x8, scoped, tag = 'scoped memory for tpu_custom_call.1']
    #allocation7 [shape = 's32[2]{0}', space=sflag, size = 0x8, scoped, tag = 'scoped memory for tpu_custom_call.1']
    #allocation8 [shape = 'u8[8192]{0}', space=vmem, size = 0x2000, scoped, tag = 'input window, operand 1']
    #allocation9 [shape = 's32[2]{0}', space=sflag, size = 0x8, scoped, tag = 'scoped memory for tpu_custom_call.1']
    #allocation10 [shape = 'u8[8192]{0}', space=vmem, size = 0x2000, scoped, tag = 'input window, operand 2']
    #allocation11 [shape = 'u8[8192]{0}', space=vmem, size = 0x2000, scoped, tag = 'output window, operand 0']
    %8 = vsyncpa [#allocation6], 0
    %s9 = scalar_lea.sflag [#allocation6], 1
    %10 = vsyncpa %s9, 0
    %11 = vsyncpa [#allocation9], 0
    %s12 = scalar_lea.sflag [#allocation9], 1
    %13 = vsyncpa %s12, 0
    %14 = vsyncpa [#allocation7], 0
    %s15 = scalar_lea.sflag [#allocation7], 1
    %16 = vsyncpa %s15, 0
    loop: start=0, step=1, limit=4
    $region2: #{tpu_custom_call.1} parent=1 // loop_pre_header
      _
    $region3: #{tpu_custom_call.1} parent=1 // loop_header
      %s18 = sphi 0, %s22
      %p19 = scmp.ge.s32.totalorder %s18, 4
      %s25 = sphi 0, %s44
      %s26 = sphi 0, %s40
      %s27 = sphi 0, %s36
      %s28 = sphi 0, %s25
      %s29 = sphi 0, %s26
      %s30 = sphi 0, %s27
      %s31 = sphi 0, %s28
      %s32 = sphi 0, %s29
      %s33 = sphi 0, %s30
      %s49 = sphi 0, %s51
      %s52 = sphi 0, %s49
      %s53 = sphi 0, %s52
      %s69 = sphi 0, %s53
      %s77 = sphi 0, %s79
      %s80 = sphi 0, %s77
      %s81 = sphi 0, %s80
      %s97 = sphi 0, %s81
      %s105 = sphi 0, %s107
      %s108 = sphi 0, %s105
      %s109 = sphi 0, %s108
      %s125 = sphi 0, %s109
      %s133 = sphi 0, %s135
      %s136 = sphi 0, %s133
      %s137 = sphi 0, %s136
      %s153 = sphi 0, %s137
    $region4: #{tpu_custom_call.1} parent=1 // loop_header_branch
      %21 = sbr.rel (%p19) target = $region8
    $region5: #{tpu_custom_call.1} parent=1 // loop_body
      %s23 = ssub.s32 %s18, 1
      %s24 = ssub.s32 %s18, 2
      %s34 = sadd.s32 1, %s27
      %p35 = scmp.ge.s32.totalorder %s34, 1
      %s36 = scalar_select %p35, 0, %s34
      %s37 = sadd.s32 1, %s26
      %s38 = scalar_select %p35, %s37, %s26
      %p39 = scmp.ge.s32.totalorder %s38, 1
      %s40 = scalar_select %p39, 0, %s38
      %s41 = sadd.s32 1, %s25
      %s42 = scalar_select %p39, %s41, %s25
      %p43 = scmp.ge.s32.totalorder %s42, 2
      %s44 = scalar_select %p43, 0, %s42
      %s45 = ssub.s32 %s25, %s44
      %s46 = ssub.s32 %s26, %s40
      %s47 = sor.u32 %s45, %s46
      %p48 = scmp.eq.s32.totalorder %s47, 0
      %s50 = sadd.s32 %s49, 1
      %s51 = scalar_select %p48, %s49, %s50
      %p54 = pneg %p48
      %p55 = scmp.eq.s32.totalorder %s18, 1
      %p56 = por %p54, %p55
      %p57 = scmp.ne.s32.totalorder %s49, %s52
      %p58 = scmp.eq.s32.totalorder %s18, 0
      %p59 = por %p57, %p58
      %p60 = scmp.ne.s32.totalorder %s49, %s52
      %p61 = scmp.eq.s32.totalorder %s23, 1
      %p62 = por %p60, %p61
      %p63 = scmp.ne.s32.totalorder %s52, %s53
      %p64 = scmp.eq.s32.totalorder %s23, 0
      %p65 = por %p63, %p64
      %p66 = scmp.ne.s32.totalorder %s52, %s53
      %p67 = scmp.eq.s32.totalorder %s24, 1
      %p68 = por %p66, %p67
      %p70 = scmp.ne.s32.totalorder %s53, %s69
      %p71 = scmp.eq.s32.totalorder %s24, 0
      %p72 = por %p70, %p71
      %s73 = ssub.s32 %s25, %s44
      %s74 = ssub.s32 %s27, %s36
      %s75 = sor.u32 %s73, %s74
      %p76 = scmp.eq.s32.totalorder %s75, 0
      %s78 = sadd.s32 %s77, 1
      %s79 = scalar_select %p76, %s77, %s78
      %p82 = pneg %p76
      %p83 = scmp.eq.s32.totalorder %s18, 1
      %p84 = por %p82, %p83
      %p85 = scmp.ne.s32.totalorder %s77, %s80
      %p86 = scmp.eq.s32.totalorder %s18, 0
      %p87 = por %p85, %p86
      %p88 = scmp.ne.s32.totalorder %s77, %s80
      %p89 = scmp.eq.s32.totalorder %s23, 1
      %p90 = por %p88, %p89
      %p91 = scmp.ne.s32.totalorder %s80, %s81
      %p92 = scmp.eq.s32.totalorder %s23, 0
      %p93 = por %p91, %p92
      %p94 = scmp.ne.s32.totalorder %s80, %s81
      %p95 = scmp.eq.s32.totalorder %s24, 1
      %p96 = por %p94, %p95
      %p98 = scmp.ne.s32.totalorder %s81, %s97
      %p99 = scmp.eq.s32.totalorder %s24, 0
      %p100 = por %p98, %p99
      %s101 = ssub.s32 %s25, %s44
      %s102 = ssub.s32 %s27, %s36
      %s103 = sor.u32 %s101, %s102
      %p104 = scmp.eq.s32.totalorder %s103, 0
      %s106 = sadd.s32 %s105, 1
      %s107 = scalar_select %p104, %s105, %s106
      %p110 = pneg %p104
      %p111 = scmp.eq.s32.totalorder %s18, 1
      %p112 = por %p110, %p111
      %p113 = scmp.ne.s32.totalorder %s105, %s108
      %p114 = scmp.eq.s32.totalorder %s18, 0
      %p115 = por %p113, %p114
      %p116 = scmp.ne.s32.totalorder %s105, %s108
      %p117 = scmp.eq.s32.totalorder %s23, 1
      %p118 = por %p116, %p117
      %p119 = scmp.ne.s32.totalorder %s108, %s109
      %p120 = scmp.eq.s32.totalorder %s23, 0
      %p121 = por %p119, %p120
      %p122 = scmp.ne.s32.totalorder %s108, %s109
      %p123 = scmp.eq.s32.totalorder %s24, 1
      %p124 = por %p122, %p123
      %p126 = scmp.ne.s32.totalorder %s109, %s125
      %p127 = scmp.eq.s32.totalorder %s24, 0
      %p128 = por %p126, %p127
      %s129 = ssub.s32 %s25, %s44
      %s130 = ssub.s32 %s26, %s40
      %s131 = sor.u32 %s129, %s130
      %p132 = scmp.eq.s32.totalorder %s131, 0
      %s134 = sadd.s32 %s133, 1
      %s135 = scalar_select %p132, %s133, %s134
      %p138 = pneg %p132
      %p139 = scmp.eq.s32.totalorder %s18, 1
      %p140 = por %p138, %p139
      %p141 = scmp.ne.s32.totalorder %s133, %s136
      %p142 = scmp.eq.s32.totalorder %s18, 0
      %p143 = por %p141, %p142
      %p144 = scmp.ne.s32.totalorder %s133, %s136
      %p145 = scmp.eq.s32.totalorder %s23, 1
      %p146 = por %p144, %p145
      %p147 = scmp.ne.s32.totalorder %s136, %s137
      %p148 = scmp.eq.s32.totalorder %s23, 0
      %p149 = por %p147, %p148
      %p150 = scmp.ne.s32.totalorder %s136, %s137
      %p151 = scmp.eq.s32.totalorder %s24, 1
      %p152 = por %p150, %p151
      %p154 = scmp.ne.s32.totalorder %s137, %s153
      %p155 = scmp.eq.s32.totalorder %s24, 0
      %p156 = por %p154, %p155
      %p157 = scmp.le.s32.totalorder 1, %s18
      %p158 = scmp.lt.s32.totalorder %s18, 3
      %p159 = pnand %p157, %p158
      %p160 = pneg %p159
      // Predicated region
      $region9: #{tpu_custom_call.1} parent=5 // pred_check
        _
      $region10: #{tpu_custom_call.1} parent=5 // pred_check_branch
        %162 = sbr.rel (%p159) target = $region12
      $region11: #{tpu_custom_call.1} parent=5 // pred_region
        %s163 = ssub.s32 %s18, 1
      $region12: #{tpu_custom_call.1} parent=5 // pred_fallthru
        _
      %p164 = scmp.lt.s32.totalorder %s18, 2
      // Predicated region
      $region13: #{tpu_custom_call.1} parent=5 // pred_check
        %p165 = pneg %p164
      $region14: #{tpu_custom_call.1} parent=5 // pred_check_branch
        %167 = sbr.rel (%p165) target = $region16
      $region15: #{tpu_custom_call.1} parent=5 // pred_region
        // Predicated region
        $region17: #{tpu_custom_call.1} parent=15 // pred_check
          %p168 = pneg %p59
        $region18: #{tpu_custom_call.1} parent=15 // pred_check_branch
          %170 = sbr.rel (%p168) target = $region20
        $region19: #{tpu_custom_call.1} parent=15 // pred_region
          %s171 = sand.u32 %s49, 1
          %s172 = scalar_lea.sflag [#allocation6], %s171
          %s173 = sand.u32 %s49, 1
          %s174 = smul.addr %s173, 8
          %s175 = scalar_lea.vmem [#allocation5], %s174
          %s177 = ssub.s32 128, 128
          %178 = vsyncadd %s172, %s177
          %s179 = sadd.s32 %s26, %s25
          %s180 = smul.addr %s179, 128
          %s181 = scalar_lea.hbm %s0, %s180
          %s183 = sshll.u32 %s175, 4
          %s184 = int_to_ptr.vmem [resolvable:$true] %s183
          %186 = dma.hbm_to_vmem [thread:$0]  %s181, 128, %s184, %s172
        $region20: #{tpu_custom_call.1} parent=15 // pred_fallthru
          _
        // Predicated region
        $region21: #{tpu_custom_call.1} parent=15 // pred_check
          %p187 = pneg %p87
        $region22: #{tpu_custom_call.1} parent=15 // pred_check_branch
          %189 = sbr.rel (%p187) target = $region24
        $region23: #{tpu_custom_call.1} parent=15 // pred_region
          %s190 = sand.u32 %s18, 1
          %s191 = scalar_lea.sflag [#allocation9], %s190
          %s192 = sand.u32 %s77, 1
          %s193 = smul.addr %s192, 8
          %s194 = scalar_lea.vmem [#allocation8], %s193
          %s196 = ssub.s32 128, 128
          %197 = vsyncadd %s191, %s196
          %s198 = sadd.s32 %s27, %s25
          %s199 = smul.addr %s198, 128
          %s200 = scalar_lea.hbm %s1, %s199
          %s202 = sshll.u32 %s194, 4
          %s203 = int_to_ptr.vmem [resolvable:$true] %s202
          %205 = dma.hbm_to_vmem [thread:$0]  %s200, 128, %s203, %s191
        $region24: #{tpu_custom_call.1} parent=15 // pred_fallthru
          _
        // Predicated region
        $region25: #{tpu_custom_call.1} parent=15 // pred_check
          %p206 = pneg %p115
        $region26: #{tpu_custom_call.1} parent=15 // pred_check_branch
          %208 = sbr.rel (%p206) target = $region28
        $region27: #{tpu_custom_call.1} parent=15 // pred_region
          %s209 = sand.u32 %s18, 1
          %s210 = scalar_lea.sflag [#allocation9], %s209
          %s211 = sand.u32 %s105, 1
          %s212 = smul.addr %s211, 8
          %s213 = scalar_lea.vmem [#allocation10], %s212
          %s215 = ssub.s32 128, 128
          %216 = vsyncadd %s210, %s215
          %s217 = sadd.s32 %s27, %s25
          %s218 = smul.addr %s217, 128
          %s219 = scalar_lea.hbm %s2, %s218
          %s221 = sshll.u32 %s213, 4
          %s222 = int_to_ptr.vmem [resolvable:$true] %s221
          %224 = dma.hbm_to_vmem [thread:$0]  %s219, 128, %s222, %s210
        $region28: #{tpu_custom_call.1} parent=15 // pred_fallthru
          _
      $region16: #{tpu_custom_call.1} parent=5 // pred_fallthru
        _
      %p225 = scmp.le.s32.totalorder 1, %s18
      %p226 = scmp.lt.s32.totalorder %s18, 3
      %p227 = pnand %p225, %p226
      %p228 = pneg %p227
      // Predicated region
      $region29: #{tpu_custom_call.1} parent=5 // pred_check
        _
      $region30: #{tpu_custom_call.1} parent=5 // pred_check_branch
        %230 = sbr.rel (%p227) target = $region32
      $region31: #{tpu_custom_call.1} parent=5 // pred_region
        %s231 = ssub.s32 %s18, 1
        %s232 = sand.u32 %s52, 1
        %s233 = scalar_lea.sflag [#allocation6], %s232
        %s234 = sand.u32 %s52, 1
        %s235 = smul.addr %s234, 8
        %s236 = scalar_lea.vmem [#allocation5], %s235
        // Predicated region
        $region33: #{tpu_custom_call.1} parent=31 // pred_check
          %p237 = pneg %p65
        $region34: #{tpu_custom_call.1} parent=31 // pred_check_branch
          %239 = sbr.rel (%p237) target = $region36
        $region35: #{tpu_custom_call.1} parent=31 // pred_region
          %240 = dma.done %s233, 128
        $region36: #{tpu_custom_call.1} parent=31 // pred_fallthru
          _
        %s241 = sand.u32 %s23, 1
        %s242 = scalar_lea.sflag [#allocation9], %s241
        %s243 = sand.u32 %s80, 1
        %s244 = smul.addr %s243, 8
        %s245 = scalar_lea.vmem [#allocation8], %s244
        // Predicated region
        $region37: #{tpu_custom_call.1} parent=31 // pred_check
          %p246 = pneg %p93
        $region38: #{tpu_custom_call.1} parent=31 // pred_check_branch
          %248 = sbr.rel (%p246) target = $region40
        $region39: #{tpu_custom_call.1} parent=31 // pred_region
          %249 = dma.done %s242, 128
        $region40: #{tpu_custom_call.1} parent=31 // pred_fallthru
          _
        %s250 = sand.u32 %s23, 1
        %s251 = scalar_lea.sflag [#allocation9], %s250
        %s252 = sand.u32 %s108, 1
        %s253 = smul.addr %s252, 8
        %s254 = scalar_lea.vmem [#allocation10], %s253
        // Predicated region
        $region41: #{tpu_custom_call.1} parent=31 // pred_check
          %p255 = pneg %p121
        $region42: #{tpu_custom_call.1} parent=31 // pred_check_branch
          %257 = sbr.rel (%p255) target = $region44
        $region43: #{tpu_custom_call.1} parent=31 // pred_region
          %258 = dma.done %s251, 128
        $region44: #{tpu_custom_call.1} parent=31 // pred_fallthru
          _
        %s259 = sand.u32 %s52, 1
        %s260 = scalar_lea.sflag [#allocation6], %s259
        %s261 = sand.u32 %s52, 1
        %s262 = smul.addr %s261, 8
        %s263 = scalar_lea.vmem [#allocation5], %s262
        %p264 = pneg %p65
        %p265 = pneg %p62
        %s266 = sand.u32 %s23, 1
        %s267 = scalar_lea.sflag [#allocation9], %s266
        %s268 = sand.u32 %s80, 1
        %s269 = smul.addr %s268, 8
        %s270 = scalar_lea.vmem [#allocation8], %s269
        %p271 = pneg %p93
        %p272 = pneg %p90
        %s273 = sand.u32 %s23, 1
        %s274 = scalar_lea.sflag [#allocation9], %s273
        %s275 = sand.u32 %s108, 1
        %s276 = smul.addr %s275, 8
        %s277 = scalar_lea.vmem [#allocation10], %s276
        %p278 = pneg %p121
        %p279 = pneg %p118
        %p280 = pneg %p149
        %p281 = pneg %p146
        %s282 = sand.u32 %s136, 1
        %s283 = scalar_lea.sflag [#allocation7], %s282
        %s284 = sand.u32 %s136, 1
        %s285 = smul.addr %s284, 8
        %s286 = scalar_lea.vmem [#allocation11], %s285
        %p288 = scmp.eq.s32.totalorder %s30, 0
        // Predicated region
        $region45: #{tpu_custom_call.1} parent=31 // pred_check
          %p289 = pneg %p288
        $region46: #{tpu_custom_call.1} parent=31 // pred_check_branch
          %291 = sbr.rel (%p289) target = $region48
        $region47: #{tpu_custom_call.1} parent=31 // pred_region
          %v292 = vld [vmem:[%s236] sm:$0xff]
          %v293 = vmul.f32 %v292, 0.17677669
          %v294 = vpack.c.bf16 %v293, %v293
          %vm295 = vcmask 257024
          %296 = vst.msk [vmem:[#allocation2] sm:$0xf] %vm295, %v294
          %vm297 = vcmask 7168
          %298 = vst.msk [vmem:[#allocation3] sm:$0xff] %vm297, -inf
          %299 = vst.msk [vmem:[#allocation4] sm:$0xff] %vm297, 0.0
          %vm300 = vcmask 261120
          %301 = vst.msk [vmem:[%s286] sm:$0xff] %vm300, 0.0
        $region48: #{tpu_custom_call.1} parent=31 // pred_fallthru
          _
        %v302 = vld [vmem:[%s245] sm:$0xff]
        %v303 = vpack.c.bf16 %v302, %v302
        %v304 = vld [vmem:[%s254] sm:$0xff]
        %v305 = vpack.c.bf16 %v304, %v304
        %v306 = vld [vmem:[#allocation2] sm:$0xf]
        %vm307 = vcmask 261120
        %v309 = vsel %vm307, %v306, 0
        %v312 = vsel %vm307, %v303, 0
        %314 = vmatprep.subr.bf16.mxu0 0
        %315 = vmatpush1.bf16.xpose.msra.mxu0 %v312
        %316 = vmatprep.subr.bf16.mxu0 0
        %317 = vmatpush1.bf16.xpose.msra.mxu0 0
        %318 = vmatprep.subr.bf16.mxu0 0
        %319 = vmatpush1.bf16.xpose.msra.mxu0 0
        %320 = vmatprep.subr.bf16.mxu0 0
        %321 = vmatpush1.bf16.xpose.msra.mxu0 0
        %322 = vmatprep.subr.bf16.mxu0 0
        %323 = vmatpush1.bf16.xpose.msra.mxu0 0
        %324 = vmatprep.subr.bf16.mxu0 0
        %325 = vmatpush1.bf16.xpose.msra.mxu0 0
        %326 = vmatprep.subr.bf16.mxu0 0
        %327 = vmatpush1.bf16.xpose.msra.mxu0 0
        %328 = vmatprep.subr.bf16.mxu0 0
        %329 = vmatpush1.bf16.xpose.msra.mxu0 0
        %330 = vmatprep.subr.bf16.mxu0 0
        %331 = vmatpush1.bf16.xpose.msra.mxu0 0
        %332 = vmatprep.subr.bf16.mxu0 0
        %333 = vmatpush1.bf16.xpose.msra.mxu0 0
        %334 = vmatprep.subr.bf16.mxu0 0
        %335 = vmatpush1.bf16.xpose.msra.mxu0 0
        %336 = vmatprep.subr.bf16.mxu0 0
        %337 = vmatpush1.bf16.xpose.msra.mxu0 0
        %338 = vmatprep.subr.bf16.mxu0 0
        %339 = vmatpush1.bf16.xpose.msra.mxu0 0
        %340 = vmatprep.subr.bf16.mxu0 0
        %341 = vmatpush1.bf16.xpose.msra.mxu0 0
        %342 = vmatprep.subr.bf16.mxu0 0
        %343 = vmatpush1.bf16.xpose.msra.mxu0 0
        %344 = vmatprep.subr.bf16.mxu0 0
        %345 = vmatpush1.bf16.xpose.msra.mxu0 0
        %346 = vmatprep.mubr.bf16.mxu0 0
        %347 = vmatmul.mubr.bf16.gmra.mrb[0].mxu0 %v309
        %v348 = vpop.f32.mrb[0].mxu0
        %v349 = vadd.f32 0.0, %v348
        %v350 = vpop.f32.mrb[0].mxu0
        %v351 = vpop.f32.mrb[0].mxu0
        %v352 = vpop.f32.mrb[0].mxu0
        %353 = vdwg.mxu0
        %v354 = vld [vmem:[#allocation3] sm:$0xff]
        %vm355 = vcmask 64512
        %v356 = vsel %vm355, %v349, -inf
        %357 = vmax.xlane.f32.xlu0 %v356
        %v358 = vpop.xlane.xlu0 %357
        %v359 = vmax.f32 %v354, %v358
        %v360 = vsub.f32 %v354, %v359
        %v361 = vmul.f32 %v360, 1.442695
        %v362 = vpow.pop %v361
        %364 = vset.pattern.permute.xlu0 0
        %365 = vperm.xlu0 %364, %v359
        %v366 = vpop.permute.xlu0 %365
        %v368 = vsub.f32 %v349, %v366
        %v369 = vmul.f32 %v368, 1.442695
        %v370 = vpow.pop %v369
        %v371 = vld [vmem:[#allocation4] sm:$0xff]
        %v372 = vmul.f32 %v362, %v371
        %v373 = vsel %vm355, %v370, 0.0
        %374 = vadd.xlane.f32.xlu0 %v373
        %v375 = vpop.xlane.xlu0 %374
        %v376 = vadd.f32 %v372, %v375
        %vm377 = vcmask 7168
        %378 = vst.msk [vmem:[#allocation4] sm:$0xff] %vm377, %v376
        %v379 = vld [vmem:[%s286] sm:$0xff]
        %381 = vset.pattern.permute.xlu0 0
        %382 = vperm.xlu0 %381, %v362
        %v383 = vpop.permute.xlu0 %382
        %v385 = vmul.f32 %v383, %v379
        %v386 = vpack.c.bf16 %v370, %v370
        %v388 = vsel %vm355, %v386, 0
        %vm390 = vcmask 1043456
        %v392 = vsel %vm390, %v305, 0
        %394 = vmatprep.subr.bf16.mxu0 0
        %395 = vmatpush1.bf16.msra.mxu0 %v392
        %396 = vmatprep.subr.bf16.mxu0 0
        %397 = vmatpush1.bf16.msra.mxu0 0
        %398 = vmatprep.subr.bf16.mxu0 0
        %399 = vmatpush1.bf16.msra.mxu0 0
        %400 = vmatprep.subr.bf16.mxu0 0
        %401 = vmatpush1.bf16.msra.mxu0 0
        %402 = vmatprep.subr.bf16.mxu0 0
        %403 = vmatpush1.bf16.msra.mxu0 0
        %404 = vmatprep.subr.bf16.mxu0 0
        %405 = vmatpush1.bf16.msra.mxu0 0
        %406 = vmatprep.subr.bf16.mxu0 0
        %407 = vmatpush1.bf16.msra.mxu0 0
        %408 = vmatprep.subr.bf16.mxu0 0
        %409 = vmatpush1.bf16.msra.mxu0 0
        %410 = vmatprep.subr.bf16.mxu0 0
        %411 = vmatpush1.bf16.msra.mxu0 0
        %412 = vmatprep.subr.bf16.mxu0 0
        %413 = vmatpush1.bf16.msra.mxu0 0
        %414 = vmatprep.subr.bf16.mxu0 0
        %415 = vmatpush1.bf16.msra.mxu0 0
        %416 = vmatprep.subr.bf16.mxu0 0
        %417 = vmatpush1.bf16.msra.mxu0 0
        %418 = vmatprep.subr.bf16.mxu0 0
        %419 = vmatpush1.bf16.msra.mxu0 0
        %420 = vmatprep.subr.bf16.mxu0 0
        %421 = vmatpush1.bf16.msra.mxu0 0
        %422 = vmatprep.subr.bf16.mxu0 0
        %423 = vmatpush1.bf16.msra.mxu0 0
        %424 = vmatprep.subr.bf16.mxu0 0
        %425 = vmatpush1.bf16.msra.mxu0 0
        %426 = vmatprep.mubr.bf16.mxu0 0
        %427 = vmatmul.mubr.bf16.gmra.mrb[0].mxu0 %v388
        %v428 = vpop.f32.mrb[0].mxu0
        %v429 = vadd.f32 0.0, %v428
        %v430 = vpop.f32.mrb[0].mxu0
        %v431 = vpop.f32.mrb[0].mxu0
        %v432 = vpop.f32.mrb[0].mxu0
        %433 = vdwg.mxu0
        %v434 = vadd.f32 %v385, %v429
        %435 = vst.msk [vmem:[%s286] sm:$0xff] %vm307, %v434
        %436 = vst.msk [vmem:[#allocation3] sm:$0xff] %vm377, %v359
        // Predicated region
        $region49: #{tpu_custom_call.1} parent=31 // pred_check
          %p437 = pneg %p288
        $region50: #{tpu_custom_call.1} parent=31 // pred_check_branch
          %439 = sbr.rel (%p437) target = $region52
        $region51: #{tpu_custom_call.1} parent=31 // pred_region
          %v440 = vld [vmem:[#allocation4] sm:$0xff]
          %v441 = vrcp.pop %v440
          %v442 = vld [vmem:[%s286] sm:$0xff]
          %444 = vset.pattern.permute.xlu0 0
          %445 = vperm.xlu0 %444, %v441
          %v446 = vpop.permute.xlu0 %445
          %v448 = vmul.f32 %v442, %v446
          %449 = vst.msk [vmem:[%s286] sm:$0xff] %vm307, %v448
        $region52: #{tpu_custom_call.1} parent=31 // pred_fallthru
          _
        %s450 = sand.u32 %s136, 1
        %s451 = scalar_lea.sflag [#allocation7], %s450
        %s452 = sand.u32 %s136, 1
        %s453 = smul.addr %s452, 8
        %s454 = scalar_lea.vmem [#allocation11], %s453
        // Predicated region
        $region53: #{tpu_custom_call.1} parent=31 // pred_check
          %p455 = pneg %p146
        $region54: #{tpu_custom_call.1} parent=31 // pred_check_branch
          %457 = sbr.rel (%p455) target = $region56
        $region55: #{tpu_custom_call.1} parent=31 // pred_region
          %s459 = ssub.s32 128, 128
          %460 = vsyncadd %s451, %s459
          %s461 = sadd.s32 %s29, %s28
          %s462 = smul.addr %s461, 128
          %s463 = scalar_lea.hbm %s3, %s462
          %s465 = sshll.u32 %s454, 4
          %s466 = int_to_ptr.vmem [resolvable:$true] %s465
          %468 = dma.vmem_to_hbm [thread:$0]  %s466, 128, %s463, %s451
        $region56: #{tpu_custom_call.1} parent=31 // pred_fallthru
          _
      $region32: #{tpu_custom_call.1} parent=5 // pred_fallthru
        _
      %p469 = scmp.le.s32.totalorder 2, %s18
      // Predicated region
      $region57: #{tpu_custom_call.1} parent=5 // pred_check
        %p470 = pneg %p469
      $region58: #{tpu_custom_call.1} parent=5 // pred_check_branch
        %472 = sbr.rel (%p470) target = $region60
      $region59: #{tpu_custom_call.1} parent=5 // pred_region
        %s473 = ssub.s32 %s18, 2
        // Predicated region
        $region61: #{tpu_custom_call.1} parent=59 // pred_check
          %p474 = pneg %p152
        $region62: #{tpu_custom_call.1} parent=59 // pred_check_branch
          %476 = sbr.rel (%p474) target = $region64
        $region63: #{tpu_custom_call.1} parent=59 // pred_region
          %s477 = sand.u32 %s137, 1
          %s478 = scalar_lea.sflag [#allocation7], %s477
          %s479 = sand.u32 %s137, 1
          %s480 = smul.addr %s479, 8
          %s481 = scalar_lea.vmem [#allocation11], %s480
          %482 = dma.done %s478, 128
        $region64: #{tpu_custom_call.1} parent=59 // pred_fallthru
          _
      $region60: #{tpu_custom_call.1} parent=5 // pred_fallthru
        _
    $region6: #{tpu_custom_call.1} parent=1 // loop_footer
      %s22 = sadd.s32 1, %s18
    $region7: #{tpu_custom_call.1} parent=1 // loop_footer_branch
      %17 = sbr.rel target = $region3
    $region8: #{tpu_custom_call.1} parent=1 // loop_exit
      _
    %483 = vsyncpa [#allocation6], 1
    %s484 = scalar_lea.sflag [#allocation6], 1
    %485 = vsyncpa %s484, 1
    %486 = vsyncpa [#allocation9], 1
    %s487 = scalar_lea.sflag [#allocation9], 1
    %488 = vsyncpa %s487, 1
    %489 = vsyncpa [#allocation7], 1
    %s490 = scalar_lea.sflag [#allocation7], 1
    %491 = vsyncpa %s490, 1

</llo_original>
